<compile_context>
chip_gen: v6e
topology: v6e:2x2x1
jax: 0.10.0
libtpu: 0.0.40
codegen_flags: <defaults>
</compile_context>

<pallas_src>
import jax
import jax.numpy as jnp
from jax.experimental import pallas as pl
from jax.experimental.pallas import tpu as pltpu

IN_DIM = 2
OUT_DIM = 1
HIDDEN = 20        # torch hidden width
HIDDEN_PAD = 24    # padded to the 8-sublane f32 grid (zero rows/cols, exact math)


def make_pinn_kernel(act_dtype):
    def pinn_kernel(x_ref, t_ref,
                    w1_ref, b1_ref,
                    w2_ref, b2_ref,
                    w3_ref, b3_ref,
                    w4_ref, b4_ref,
                    o_ref):
        # x_ref, t_ref: (1, TB); weights (out, in) padded; biases (out, 1); o_ref: (1, TB).
        x = x_ref[...]                                   # (1, TB) f32
        t = t_ref[...]                                   # (1, TB) f32
        w1 = w1_ref[...]                                 # (24, 2) f32

        # Layer 1 as a VPU broadcast-FMA (a K=2 matmul would waste a full MXU push).
        z = w1[:, 0:1] * x + w1[:, 1:2] * t + b1_ref[...]        # (24, TB) f32
        h = jnp.tanh(z.astype(act_dtype))                         # tanh in act_dtype

        # Layers 2 and 3: 24x24 MXU matmuls, f32 accumulation, tanh in act_dtype.
        z = jnp.dot(w2_ref[...].astype(act_dtype), h,
                    preferred_element_type=jnp.float32) + b2_ref[...]
        h = jnp.tanh(z.astype(act_dtype))                         # (24, TB)
        z = jnp.dot(w3_ref[...].astype(act_dtype), h,
                    preferred_element_type=jnp.float32) + b3_ref[...]
        h = jnp.tanh(z.astype(act_dtype))                         # (24, TB)

        # Output layer: (1, 24) @ (24, TB) -> (1, TB), lane-dense f32 store.
        o_ref[...] = (jnp.dot(w4_ref[...].astype(act_dtype), h,
                              preferred_element_type=jnp.float32)
                      + b4_ref[...])
    return pinn_kernel


def _default_act_dtype():
    """bf16 activations on chips with bf16 VPU/EUP (v6e/v7x), f32 otherwise."""
    try:
        kind = jax.devices()[0].device_kind.lower()
    except Exception:
        return jnp.float32
    if any(s in kind for s in ("v2", "v3", "v4", "v5", "lite")):
        return jnp.float32
    return jnp.bfloat16


def _pad_params(params):
    """Zero-pad hidden width 20 -> 24; numerically identical (tanh(0)=0, zero cols)."""
    (w1, b1), (w2, b2), (w3, b3), (w4, b4) = params
    p = HIDDEN_PAD - HIDDEN
    w1p = jnp.pad(w1, ((0, p), (0, 0)))
    b1p = jnp.pad(b1, ((0, p), (0, 0)))
    w2p = jnp.pad(w2, ((0, p), (0, p)))
    b2p = jnp.pad(b2, ((0, p), (0, 0)))
    w3p = jnp.pad(w3, ((0, p), (0, p)))
    b3p = jnp.pad(b3, ((0, p), (0, 0)))
    w4p = jnp.pad(w4, ((0, 0), (0, p)))
    return (w1p, b1p), (w2p, b2p), (w3p, b3p), (w4p, b4)


def pinn_forward(x, t, params, *, tile_b=8192, act_dtype=None):
    """x, t: (N, 1) float32 -> (N, 1) float32."""
    N = x.shape[0]
    if act_dtype is None:
        act_dtype = _default_act_dtype()

    # Lane-dense batch tile: multiple of 128, no larger than the (rounded) batch.
    tile_b = max(128, min(int(tile_b), pl.cdiv(N, 128) * 128))
    # Keep >= 2 grid steps when the batch allows it so dimension_semantics
    # ("parallel",) can feed both TensorCores on v7x (negligible cost elsewhere).
    if N > 256:
        half = max(128, pl.cdiv(pl.cdiv(N, 2), 128) * 128)
        tile_b = min(tile_b, half)
    n_tiles = pl.cdiv(N, tile_b)

    # (N, 1) -> (1, N) is a free row-major reshape.  No host-side pad: the ragged
    # trailing block is handled by Pallas (OOB lanes masked on store; compute is
    # lane-isolated so tail garbage never mixes into valid lanes).
    x_row = x.reshape(1, N)
    t_row = t.reshape(1, N)

    (w1, b1), (w2, b2), (w3, b3), (w4, b4) = _pad_params(params)

    def resident(shape):
        # Full small weight / bias arrays, same block at every grid point
        # (grid-invariant -> stays resident in VMEM, no per-step re-DMA).
        return pl.BlockSpec(shape, lambda i: (0, 0))

    batch_spec = pl.BlockSpec((1, tile_b), lambda i: (0, i))

    out = pl.pallas_call(
        make_pinn_kernel(act_dtype),
        out_shape=jax.ShapeDtypeStruct((1, N), jnp.float32),
        grid_spec=pltpu.PrefetchScalarGridSpec(
            num_scalar_prefetch=0,
            grid=(n_tiles,),
            in_specs=[
                batch_spec,                                              # x (1, N)
                batch_spec,                                              # t (1, N)
                resident((HIDDEN_PAD, IN_DIM)), resident((HIDDEN_PAD, 1)),   # layer 1
                resident((HIDDEN_PAD, HIDDEN_PAD)), resident((HIDDEN_PAD, 1)),  # layer 2
                resident((HIDDEN_PAD, HIDDEN_PAD)), resident((HIDDEN_PAD, 1)),  # layer 3
                resident((OUT_DIM, HIDDEN_PAD)), resident((OUT_DIM, 1)),        # layer 4
            ],
            out_specs=pl.BlockSpec((1, tile_b), lambda i: (0, i)),
        ),
        compiler_params=pltpu.CompilerParams(
            dimension_semantics=("parallel",)),
    )(x_row, t_row, w1, b1, w2, b2, w3, b3, w4, b4)

    # (1, N) -> (N, 1) is a free reshape; nothing to crop.
    return out.reshape(N, 1)


def init_params(key):
    """Deterministic init matching the PyTorch layer shapes.

    Weights are stored (out, in) and biases (out, 1), exactly like torch.nn.Linear
    (up to the trailing unit dim on the bias), since the kernel computes W @ h.
    """
    dims = [(HIDDEN, IN_DIM), (HIDDEN, HIDDEN), (HIDDEN, HIDDEN), (OUT_DIM, HIDDEN)]
    params = []
    for (dout, din) in dims:
        key, kw, kb = jax.random.split(key, 3)
        bound = 1.0 / float(jnp.sqrt(float(din)))
        w = jax.random.uniform(kw, (dout, din), jnp.float32, -bound, bound)
        b = jax.random.uniform(kb, (dout, 1), jnp.float32, -bound, bound)
        params.append((w, b))
    return params


def pinn_forward_ref(x, t, params):
    """Pure-JAX reference for correctness check (torch orientation)."""
    h = jnp.concatenate((x, t), axis=1)                    # (N, 2)
    (w1, b1), (w2, b2), (w3, b3), (w4, b4) = params
    h = jnp.tanh(h @ w1.T + b1.T)
    h = jnp.tanh(h @ w2.T + b2.T)
    h = jnp.tanh(h @ w3.T + b3.T)
    return h @ w4.T + b4.T


if __name__ == "__main__":
    key = jax.random.PRNGKey(0)
    kp, kx, kt = jax.random.split(key, 3)

    params = init_params(kp)

    # Small primary check (single ragged tile, f32 activations, tight tolerance).
    N = 16
    x = jax.random.uniform(kx, (N, 1), jnp.float32)   # spatial coordinate
    t = jax.random.uniform(kt, (N, 1), jnp.float32)   # time coordinate

    out = jax.block_until_ready(pinn_forward(x, t, params, act_dtype=jnp.float32))
    ref = pinn_forward_ref(x, t, params)
    assert out.shape == (N, 1) and out.dtype == jnp.float32
    assert jnp.allclose(out, ref, atol=1e-5, rtol=1e-5), "mismatch vs reference (N=16)"

    # Multi-tile, non-tile-multiple batch: exercises the ragged trailing block
    # (masked store of the tail) and the >=2-step grid split.
    N2 = 1000
    kx2, kt2 = jax.random.split(kt)
    x2 = jax.random.uniform(kx2, (N2, 1), jnp.float32)
    t2 = jax.random.uniform(kt2, (N2, 1), jnp.float32)
    out2 = jax.block_until_ready(
        pinn_forward(x2, t2, params, tile_b=512, act_dtype=jnp.float32))
    ref2 = pinn_forward_ref(x2, t2, params)
    assert out2.shape == (N2, 1)
    assert jnp.allclose(out2, ref2, atol=1e-5, rtol=1e-5), "mismatch vs reference (N=1000)"

    # bf16-activation fast path (what v6e/v7x run by default); loose tolerance vs f32 ref.
    out3 = jax.block_until_ready(pinn_forward(x2, t2, params, act_dtype=jnp.bfloat16))
    assert out3.shape == (N2, 1)
    assert jnp.allclose(out3, ref2, atol=5e-2, rtol=5e-2), "bf16 path mismatch (N=1000)"

    print("KERNEL_OK")
</pallas_src>

<mosaic_0001>
module attributes {stable_mosaic.version = 11 : i64} {
  func.func @pinn_kernel(%arg0: i32, %arg1: memref<1x128xf32, #tpu.memory_space<vmem>>, %arg2: memref<1x128xf32, #tpu.memory_space<vmem>>, %arg3: memref<24x2xf32, #tpu.memory_space<vmem>>, %arg4: memref<24x1xf32, #tpu.memory_space<vmem>>, %arg5: memref<24x24xf32, #tpu.memory_space<vmem>>, %arg6: memref<24x1xf32, #tpu.memory_space<vmem>>, %arg7: memref<24x24xf32, #tpu.memory_space<vmem>>, %arg8: memref<24x1xf32, #tpu.memory_space<vmem>>, %arg9: memref<1x24xf32, #tpu.memory_space<vmem>>, %arg10: memref<1x1xf32, #tpu.memory_space<vmem>>, %arg11: memref<1x128xf32, #tpu.memory_space<vmem>>) attributes {dimension_semantics = [#tpu.dimension_semantics<parallel>], iteration_bounds = array<i64: 1>, scalar_prefetch = 0 : i64, scratch_operands = 0 : i64, tpu.core_type = #tpu.core_type<tc>, window_params = [{transform_indices = @transform_0, window_bounds = array<i64: 1, 128>}, {transform_indices = @transform_1, window_bounds = array<i64: 1, 128>}, {pipeline_mode = #tpu.pipeline_mode<synchronous>, transform_indices = @transform_2, window_bounds = array<i64: 24, 2>}, {pipeline_mode = #tpu.pipeline_mode<synchronous>, transform_indices = @transform_3, window_bounds = array<i64: 24, 1>}, {pipeline_mode = #tpu.pipeline_mode<synchronous>, transform_indices = @transform_4, window_bounds = array<i64: 24, 24>}, {pipeline_mode = #tpu.pipeline_mode<synchronous>, transform_indices = @transform_5, window_bounds = array<i64: 24, 1>}, {pipeline_mode = #tpu.pipeline_mode<synchronous>, transform_indices = @transform_6, window_bounds = array<i64: 24, 24>}, {pipeline_mode = #tpu.pipeline_mode<synchronous>, transform_indices = @transform_7, window_bounds = array<i64: 24, 1>}, {pipeline_mode = #tpu.pipeline_mode<synchronous>, transform_indices = @transform_8, window_bounds = array<i64: 1, 24>}, {pipeline_mode = #tpu.pipeline_mode<synchronous>, transform_indices = @transform_9, window_bounds = array<i64: 1, 1>}, {transform_indices = @transform_10, window_bounds = array<i64: 1, 128>}]} {
    %c0 = arith.constant 0 : index
    %c0_0 = arith.constant 0 : index
    %0 = vector.load %arg1[%c0, %c0_0] : memref<1x128xf32, #tpu.memory_space<vmem>>, vector<1x128xf32>
    %c0_1 = arith.constant 0 : index
    %c0_2 = arith.constant 0 : index
    %1 = vector.load %arg2[%c0_1, %c0_2] : memref<1x128xf32, #tpu.memory_space<vmem>>, vector<1x128xf32>
    %c0_3 = arith.constant 0 : index
    %c0_4 = arith.constant 0 : index
    %2 = vector.load %arg3[%c0_3, %c0_4] : memref<24x2xf32, #tpu.memory_space<vmem>>, vector<24x2xf32>
    %3 = vector.extract_strided_slice %2 {offsets = [0, 0], sizes = [24, 1], strides = [1, 1]} : vector<24x2xf32> to vector<24x1xf32>
    %4 = vector.broadcast %3 : vector<24x1xf32> to vector<24x128xf32>
    %5 = vector.broadcast %0 : vector<1x128xf32> to vector<24x128xf32>
    %6 = arith.mulf %4, %5 : vector<24x128xf32>
    %7 = vector.extract_strided_slice %2 {offsets = [0, 1], sizes = [24, 1], strides = [1, 1]} : vector<24x2xf32> to vector<24x1xf32>
    %8 = vector.broadcast %7 : vector<24x1xf32> to vector<24x128xf32>
    %9 = vector.broadcast %1 : vector<1x128xf32> to vector<24x128xf32>
    %10 = arith.mulf %8, %9 : vector<24x128xf32>
    %11 = arith.addf %6, %10 : vector<24x128xf32>
    %c0_5 = arith.constant 0 : index
    %c0_6 = arith.constant 0 : index
    %12 = vector.load %arg4[%c0_5, %c0_6] : memref<24x1xf32, #tpu.memory_space<vmem>>, vector<24x1xf32>
    %13 = vector.broadcast %12 : vector<24x1xf32> to vector<24x128xf32>
    %14 = arith.addf %11, %13 : vector<24x128xf32>
    %15 = math.tanh %14 : vector<24x128xf32>
    %c0_7 = arith.constant 0 : index
    %c0_8 = arith.constant 0 : index
    %16 = vector.load %arg5[%c0_7, %c0_8] : memref<24x24xf32, #tpu.memory_space<vmem>>, vector<24x24xf32>
    %cst = arith.constant dense<0.000000e+00> : vector<24x128xf32>
    %17 = tpu.matmul %16, %15, %cst {dimension_numbers = #tpu.dot_dimension_numbers<[1], [0], [0], [1], [0, 0, 1, 1], [], []>} : vector<24x24xf32>, vector<24x128xf32>, vector<24x128xf32> -> vector<24x128xf32>
    %c0_9 = arith.constant 0 : index
    %c0_10 = arith.constant 0 : index
    %18 = vector.load %arg6[%c0_9, %c0_10] : memref<24x1xf32, #tpu.memory_space<vmem>>, vector<24x1xf32>
    %19 = vector.broadcast %18 : vector<24x1xf32> to vector<24x128xf32>
    %20 = arith.addf %17, %19 : vector<24x128xf32>
    %21 = math.tanh %20 : vector<24x128xf32>
    %c0_11 = arith.constant 0 : index
    %c0_12 = arith.constant 0 : index
    %22 = vector.load %arg7[%c0_11, %c0_12] : memref<24x24xf32, #tpu.memory_space<vmem>>, vector<24x24xf32>
    %cst_13 = arith.constant dense<0.000000e+00> : vector<24x128xf32>
    %23 = tpu.matmul %22, %21, %cst_13 {dimension_numbers = #tpu.dot_dimension_numbers<[1], [0], [0], [1], [0, 0, 1, 1], [], []>} : vector<24x24xf32>, vector<24x128xf32>, vector<24x128xf32> -> vector<24x128xf32>
    %c0_14 = arith.constant 0 : index
    %c0_15 = arith.constant 0 : index
    %24 = vector.load %arg8[%c0_14, %c0_15] : memref<24x1xf32, #tpu.memory_space<vmem>>, vector<24x1xf32>
    %25 = vector.broadcast %24 : vector<24x1xf32> to vector<24x128xf32>
    %26 = arith.addf %23, %25 : vector<24x128xf32>
    %27 = math.tanh %26 : vector<24x128xf32>
    %c0_16 = arith.constant 0 : index
    %c0_17 = arith.constant 0 : index
    %28 = vector.load %arg9[%c0_16, %c0_17] : memref<1x24xf32, #tpu.memory_space<vmem>>, vector<1x24xf32>
    %cst_18 = arith.constant dense<0.000000e+00> : vector<1x128xf32>
    %29 = tpu.matmul %28, %27, %cst_18 {dimension_numbers = #tpu.dot_dimension_numbers<[1], [0], [0], [1], [0, 0, 1, 1], [], []>} : vector<1x24xf32>, vector<24x128xf32>, vector<1x128xf32> -> vector<1x128xf32>
    %c0_19 = arith.constant 0 : index
    %c0_20 = arith.constant 0 : index
    %30 = vector.load %arg10[%c0_19, %c0_20] : memref<1x1xf32, #tpu.memory_space<vmem>>, vector<1x1xf32>
    %31 = vector.broadcast %30 : vector<1x1xf32> to vector<1x128xf32>
    %32 = arith.addf %29, %31 : vector<1x128xf32>
    %c0_21 = arith.constant 0 : index
    %c0_22 = arith.constant 0 : index
    %33 = vector.load %arg11[%c0_21, %c0_22] : memref<1x128xf32, #tpu.memory_space<vmem>>, vector<1x128xf32>
    tpu.vector_store %arg11[%c0_21, %c0_22], %32 {strides = array<i32>} : memref<1x128xf32, #tpu.memory_space<vmem>>, vector<1x128xf32>,
    return
  }
  func.func @transform_0(%arg0: i32) -> (i32, i32) {
    %c0_i32 = arith.constant 0 : i32
    %c0_i32_0 = arith.constant 0 : i32
    return %c0_i32, %arg0 : i32, i32
  }
  func.func @transform_1(%arg0: i32) -> (i32, i32) {
    %c0_i32 = arith.constant 0 : i32
    %c0_i32_0 = arith.constant 0 : i32
    return %c0_i32, %arg0 : i32, i32
  }
  func.func @transform_2(%arg0: i32) -> (i32, i32) {
    %c0_i32 = arith.constant 0 : i32
    %c0_i32_0 = arith.constant 0 : i32
    %c0_i32_1 = arith.constant 0 : i32
    return %c0_i32, %c0_i32_0 : i32, i32
  }
  func.func @transform_3(%arg0: i32) -> (i32, i32) {
    %c0_i32 = arith.constant 0 : i32
    %c0_i32_0 = arith.constant 0 : i32
    %c0_i32_1 = arith.constant 0 : i32
    return %c0_i32, %c0_i32_0 : i32, i32
  }
  func.func @transform_4(%arg0: i32) -> (i32, i32) {
    %c0_i32 = arith.constant 0 : i32
    %c0_i32_0 = arith.constant 0 : i32
    %c0_i32_1 = arith.constant 0 : i32
    return %c0_i32, %c0_i32_0 : i32, i32
  }
  func.func @transform_5(%arg0: i32) -> (i32, i32) {
    %c0_i32 = arith.constant 0 : i32
    %c0_i32_0 = arith.constant 0 : i32
    %c0_i32_1 = arith.constant 0 : i32
    return %c0_i32, %c0_i32_0 : i32, i32
  }
  func.func @transform_6(%arg0: i32) -> (i32, i32) {
    %c0_i32 = arith.constant 0 : i32
    %c0_i32_0 = arith.constant 0 : i32
    %c0_i32_1 = arith.constant 0 : i32
    return %c0_i32, %c0_i32_0 : i32, i32
  }
  func.func @transform_7(%arg0: i32) -> (i32, i32) {
    %c0_i32 = arith.constant 0 : i32
    %c0_i32_0 = arith.constant 0 : i32
    %c0_i32_1 = arith.constant 0 : i32
    return %c0_i32, %c0_i32_0 : i32, i32
  }
  func.func @transform_8(%arg0: i32) -> (i32, i32) {
    %c0_i32 = arith.constant 0 : i32
    %c0_i32_0 = arith.constant 0 : i32
    %c0_i32_1 = arith.constant 0 : i32
    return %c0_i32, %c0_i32_0 : i32, i32
  }
  func.func @transform_9(%arg0: i32) -> (i32, i32) {
    %c0_i32 = arith.constant 0 : i32
    %c0_i32_0 = arith.constant 0 : i32
    %c0_i32_1 = arith.constant 0 : i32
    return %c0_i32, %c0_i32_0 : i32, i32
  }
  func.func @transform_10(%arg0: i32) -> (i32, i32) {
    %c0_i32 = arith.constant 0 : i32
    %c0_i32_0 = arith.constant 0 : i32
    return %c0_i32, %arg0 : i32, i32
  }
}

</mosaic_0001>

<llo_original>
// kernel: tpu_custom_call.1
$region0: #{tpu_custom_call.1}
  #allocation0 [shape = 'u32[]', space=smem, size = 0x4, offset = 0x4, fixed_abs, tag = 'smem constant byte address 0x4 - core index']
  #allocation1 [shape = 'u32[144,128]{1,0:T(1,128)}', space=vmem, size = 0x12000, scoped, tag = 'internal scratch']
  #allocation2 [shape = 'f32[1,1]{1,0:T(1,128)S(1)}', space=vmem, size = 0x200, scoped, tag = 'scoped memory for tpu_custom_call.1']
  %s0 = inlined_call_operand.vmem [shape: f32[1,16], index: 0, kind: input, shape index: {}]
  %s1 = inlined_call_operand.vmem [shape: f32[1,16], index: 1, kind: input, shape index: {}]
  %s2 = inlined_call_operand.vmem [shape: f32[24,2], index: 2, kind: input, shape index: {}]
  %s3 = inlined_call_operand.vmem [shape: f32[24,1], index: 3, kind: input, shape index: {}]
  %s4 = inlined_call_operand.vmem [shape: f32[24,24], index: 4, kind: input, shape index: {}]
  %s5 = inlined_call_operand.vmem [shape: f32[24,1], index: 5, kind: input, shape index: {}]
  %s6 = inlined_call_operand.vmem [shape: f32[24,24], index: 6, kind: input, shape index: {}]
  %s7 = inlined_call_operand.vmem [shape: f32[24,1], index: 7, kind: input, shape index: {}]
  %s8 = inlined_call_operand.vmem [shape: f32[1,24], index: 8, kind: input, shape index: {}]
  %s9 = inlined_call_operand.<no memory space> [shape: f32[1,1], index: 9, kind: input, shape index: {}]
  %s10 = inlined_call_operand.hbm [shape: f32[1,16], index: 10, kind: output, shape index: {}]
  %s11 = sld [smem:[#allocation0]]
  $region50: #{tpu_custom_call.1} parent=0
    _
  %s13 = ssub.s32 1, %s11
  %s14 = scalar_select 0, %s13, %s11
  %v15 = vstv %s9
  %16 = vst [vmem:[#allocation2] sm:$0x1] %v15
  $region1: #{tpu_custom_call.1} parent=0
    #allocation3 [shape = 'u8[512]{0}', space=vmem, size = 0x400, scoped, tag = 'output window, operand 0, single buffered']
    #allocation4 [shape = 's32[1]{0}', space=sflag, size = 0x4, scoped, tag = 'scoped memory for tpu_custom_call.1']
    %17 = vsyncpa [#allocation4], 0
    // Predicated region
    $region2: #{tpu_custom_call.1} parent=1 // pred_check
      _
    $region3: #{tpu_custom_call.1} parent=1 // pred_check_branch
      %19 = sbr.rel (0) target = $region5
    $region4: #{tpu_custom_call.1} parent=1 // pred_region
      _
    $region5: #{tpu_custom_call.1} parent=1 // pred_fallthru
      _
    // Predicated region
    $region6: #{tpu_custom_call.1} parent=1 // pred_check
      _
    $region7: #{tpu_custom_call.1} parent=1 // pred_check_branch
      %21 = sbr.rel (0) target = $region9
    $region8: #{tpu_custom_call.1} parent=1 // pred_region
      _
    $region9: #{tpu_custom_call.1} parent=1 // pred_fallthru
      _
    // Predicated region
    $region10: #{tpu_custom_call.1} parent=1 // pred_check
      _
    $region11: #{tpu_custom_call.1} parent=1 // pred_check_branch
      %23 = sbr.rel (0) target = $region13
    $region12: #{tpu_custom_call.1} parent=1 // pred_region
      _
    $region13: #{tpu_custom_call.1} parent=1 // pred_fallthru
      _
    // Predicated region
    $region14: #{tpu_custom_call.1} parent=1 // pred_check
      _
    $region15: #{tpu_custom_call.1} parent=1 // pred_check_branch
      %25 = sbr.rel (0) target = $region17
    $region16: #{tpu_custom_call.1} parent=1 // pred_region
      _
    $region17: #{tpu_custom_call.1} parent=1 // pred_fallthru
      _
    // Predicated region
    $region18: #{tpu_custom_call.1} parent=1 // pred_check
      _
    $region19: #{tpu_custom_call.1} parent=1 // pred_check_branch
      %27 = sbr.rel (0) target = $region21
    $region20: #{tpu_custom_call.1} parent=1 // pred_region
      _
    $region21: #{tpu_custom_call.1} parent=1 // pred_fallthru
      _
    // Predicated region
    $region22: #{tpu_custom_call.1} parent=1 // pred_check
      _
    $region23: #{tpu_custom_call.1} parent=1 // pred_check_branch
      %29 = sbr.rel (0) target = $region25
    $region24: #{tpu_custom_call.1} parent=1 // pred_region
      _
    $region25: #{tpu_custom_call.1} parent=1 // pred_fallthru
      _
    // Predicated region
    $region26: #{tpu_custom_call.1} parent=1 // pred_check
      _
    $region27: #{tpu_custom_call.1} parent=1 // pred_check_branch
      %31 = sbr.rel (0) target = $region29
    $region28: #{tpu_custom_call.1} parent=1 // pred_region
      _
    $region29: #{tpu_custom_call.1} parent=1 // pred_fallthru
      _
    // Predicated region
    $region30: #{tpu_custom_call.1} parent=1 // pred_check
      _
    $region31: #{tpu_custom_call.1} parent=1 // pred_check_branch
      %33 = sbr.rel (0) target = $region33
    $region32: #{tpu_custom_call.1} parent=1 // pred_region
      _
    $region33: #{tpu_custom_call.1} parent=1 // pred_fallthru
      _
    // Predicated region
    $region34: #{tpu_custom_call.1} parent=1 // pred_check
      _
    $region35: #{tpu_custom_call.1} parent=1 // pred_check_branch
      %35 = sbr.rel (0) target = $region37
    $region36: #{tpu_custom_call.1} parent=1 // pred_region
      _
    $region37: #{tpu_custom_call.1} parent=1 // pred_fallthru
      _
    // Predicated region
    $region38: #{tpu_custom_call.1} parent=1 // pred_check
      _
    $region39: #{tpu_custom_call.1} parent=1 // pred_check_branch
      %37 = sbr.rel (0) target = $region41
    $region40: #{tpu_custom_call.1} parent=1 // pred_region
      _
    $region41: #{tpu_custom_call.1} parent=1 // pred_fallthru
      _
    %v38 = vld [vmem:[%s0] sm:$0x1]
    %v39 = vld [vmem:[%s1] sm:$0x1]
    %v40 = vld [vmem:[%s2] sm:$0xff]
    %v41 = vld [vmem:[%s2 + $0x8] sm:$0xff]
    %v42 = vld [vmem:[%s2 + $0x10] sm:$0xff]
    %44 = vset.pattern.permute.xlu0 0
    %45 = vperm.xlu0 %44, %v40
    %v46 = vpop.permute.xlu0 %45
    %49 = vset.pattern.permute.xlu0 0
    %50 = vperm.xlu0 %49, %v41
    %v51 = vpop.permute.xlu0 %50
    %54 = vset.pattern.permute.xlu0 0
    %55 = vperm.xlu0 %54, %v42
    %v56 = vpop.permute.xlu0 %55
    %v59 = vlaneseq
    %v60 = vshrl.u32 %v59, 7
    %v61 = vsub.s32 0, %v60
    %v62 = vrot.slane %v38, %v61
    %v64 = vmul.f32 %v46, %v62
    %v65 = vmul.f32 %v51, %v62
    %v66 = vmul.f32 %v56, %v62
    %67 = vset.pattern.permute.xlu0 1
    %68 = vperm.xlu0 %67, %v40
    %v69 = vpop.permute.xlu0 %68
    %71 = vset.pattern.permute.xlu0 1
    %72 = vperm.xlu0 %71, %v41
    %v73 = vpop.permute.xlu0 %72
    %75 = vset.pattern.permute.xlu0 1
    %76 = vperm.xlu0 %75, %v42
    %v77 = vpop.permute.xlu0 %76
    %v80 = vlaneseq
    %v81 = vshrl.u32 %v80, 7
    %v82 = vsub.s32 0, %v81
    %v83 = vrot.slane %v39, %v82
    %v85 = vmul.f32 %v69, %v83
    %v86 = vmul.f32 %v73, %v83
    %v87 = vmul.f32 %v77, %v83
    %v88 = vadd.f32 %v64, %v85
    %v89 = vadd.f32 %v65, %v86
    %v90 = vadd.f32 %v66, %v87
    %v91 = vld [vmem:[%s3] sm:$0xff]
    %v92 = vld [vmem:[%s3 + $0x8] sm:$0xff]
    %v93 = vld [vmem:[%s3 + $0x10] sm:$0xff]
    %95 = vset.pattern.permute.xlu0 0
    %96 = vperm.xlu0 %95, %v91
    %v97 = vpop.permute.xlu0 %96
    %100 = vset.pattern.permute.xlu0 0
    %101 = vperm.xlu0 %100, %v92
    %v102 = vpop.permute.xlu0 %101
    %105 = vset.pattern.permute.xlu0 0
    %106 = vperm.xlu0 %105, %v93
    %v107 = vpop.permute.xlu0 %106
    %v109 = vadd.f32 %v88, %v97
    %v110 = vadd.f32 %v89, %v102
    %v111 = vadd.f32 %v90, %v107
    %v112 = vtanh.pop %v109
    %v113 = vtanh.pop %v110
    %v114 = vtanh.pop %v111
    %v115 = vld [vmem:[%s4] sm:$0xff]
    %v116 = vld [vmem:[%s4 + $0x8] sm:$0xff]
    %v117 = vld [vmem:[%s4 + $0x10] sm:$0xff]
    %v118 = vld [vmem:[%s5] sm:$0xff]
    %v119 = vld [vmem:[%s5 + $0x8] sm:$0xff]
    %v120 = vld [vmem:[%s5 + $0x10] sm:$0xff]
    %122 = vset.pattern.permute.xlu0 0
    %123 = vperm.xlu0 %122, %v118
    %v124 = vpop.permute.xlu0 %123
    %127 = vset.pattern.permute.xlu0 0
    %128 = vperm.xlu0 %127, %v119
    %v129 = vpop.permute.xlu0 %128
    %132 = vset.pattern.permute.xlu0 0
    %133 = vperm.xlu0 %132, %v120
    %v134 = vpop.permute.xlu0 %133
    %vm136 = vcmask 195584
    %v138 = vsel %vm136, %v115, 0
    %v141 = vsel %vm136, %v116, 0
    %v144 = vsel %vm136, %v117, 0
    %146 = vmatprep.subr.mxu0 0.0
    %147 = vmatpush1.msra.mxu0 0.0
    %148 = vmatprep.subr.mxu0 0.0
    %149 = vmatpush1.msra.mxu0 0.0
    %150 = vmatprep.subr.mxu0 0.0
    %151 = vmatpush1.msra.mxu0 0.0
    %152 = vmatprep.subr.mxu0 0.0
    %153 = vmatpush1.msra.mxu0 0.0
    %154 = vmatprep.subr.mxu0 0.0
    %155 = vmatpush1.msra.mxu0 0.0
    %156 = vmatprep.subr.mxu0 0.0
    %157 = vmatpush1.msra.mxu0 0.0
    %158 = vmatprep.subr.mxu0 0.0
    %159 = vmatpush1.msra.mxu0 0.0
    %160 = vmatprep.subr.mxu0 0.0
    %161 = vmatpush1.msra.mxu0 0.0
    %162 = vmatprep.subr.mxu0 0.0
    %163 = vmatpush1.msra.mxu0 0.0
    %164 = vmatprep.subr.mxu0 0.0
    %165 = vmatpush1.msra.mxu0 0.0
    %166 = vmatprep.subr.mxu0 0.0
    %167 = vmatpush1.msra.mxu0 0.0
    %168 = vmatprep.subr.mxu0 0.0
    %169 = vmatpush1.msra.mxu0 0.0
    %170 = vmatprep.subr.mxu0 0.0
    %171 = vmatpush1.msra.mxu0 0.0
    %172 = vmatprep.subr.mxu0 0.0
    %173 = vmatpush1.msra.mxu0 %v114
    %174 = vmatprep.subr.mxu0 0.0
    %175 = vmatpush1.msra.mxu0 %v113
    %176 = vmatprep.subr.mxu0 0.0
    %177 = vmatpush1.msra.mxu0 %v112
    %178 = vmatprep.subr.mxu0 0.0
    %179 = vmatpush2.msra.mxu0 0.0
    %180 = vmatprep.subr.mxu0 0.0
    %181 = vmatpush2.msra.mxu0 0.0
    %182 = vmatprep.subr.mxu0 0.0
    %183 = vmatpush2.msra.mxu0 0.0
    %184 = vmatprep.subr.mxu0 0.0
    %185 = vmatpush2.msra.mxu0 0.0
    %186 = vmatprep.subr.mxu0 0.0
    %187 = vmatpush2.msra.mxu0 0.0
    %188 = vmatprep.subr.mxu0 0.0
    %189 = vmatpush2.msra.mxu0 0.0
    %190 = vmatprep.subr.mxu0 0.0
    %191 = vmatpush2.msra.mxu0 0.0
    %192 = vmatprep.subr.mxu0 0.0
    %193 = vmatpush2.msra.mxu0 0.0
    %194 = vmatprep.subr.mxu0 0.0
    %195 = vmatpush2.msra.mxu0 0.0
    %196 = vmatprep.subr.mxu0 0.0
    %197 = vmatpush2.msra.mxu0 0.0
    %198 = vmatprep.subr.mxu0 0.0
    %199 = vmatpush2.msra.mxu0 0.0
    %200 = vmatprep.subr.mxu0 0.0
    %201 = vmatpush2.msra.mxu0 0.0
    %202 = vmatprep.subr.mxu0 0.0
    %203 = vmatpush2.msra.mxu0 0.0
    %204 = vmatprep.subr.mxu0 0.0
    %205 = vmatpush2.msra.mxu0 0.0
    %206 = vmatprep.subr.mxu0 0.0
    %207 = vmatpush2.msra.mxu0 0.0
    %208 = vmatprep.subr.mxu0 0.0
    %209 = vmatpush2.msra.mxu0 0.0
    %210 = vmatprep.mubr.f32.mxu0 0.0
    %211 = vmatmul.mubr.f32.gmra.mxu0 %v138
    %v212 = vpop.f32.mrf.mxu0
    %v213 = vadd.f32 %v124, %v212
    %v214 = vpop.f32.mrf.mxu0
    %215 = vmatprep.mubr.f32.mxu0 0.0
    %216 = vmatmul.mubr.f32.gmra.mxu0 %v141
    %v217 = vpop.f32.mrf.mxu0
    %v218 = vadd.f32 %v129, %v217
    %v219 = vpop.f32.mrf.mxu0
    %220 = vmatprep.mubr.f32.mxu0 0.0
    %221 = vmatmul.mubr.f32.gmra.mxu0 %v144
    %v222 = vpop.f32.mrf.mxu0
    %v223 = vadd.f32 %v134, %v222
    %v224 = vpop.f32.mrf.mxu0
    %225 = vdwg.mxu0
    %v226 = vtanh.pop %v213
    %v227 = vtanh.pop %v218
    %v228 = vtanh.pop %v223
    %v229 = vld [vmem:[%s6] sm:$0xff]
    %v230 = vld [vmem:[%s6 + $0x8] sm:$0xff]
    %v231 = vld [vmem:[%s6 + $0x10] sm:$0xff]
    %v232 = vld [vmem:[%s7] sm:$0xff]
    %v233 = vld [vmem:[%s7 + $0x8] sm:$0xff]
    %v234 = vld [vmem:[%s7 + $0x10] sm:$0xff]
    %236 = vset.pattern.permute.xlu0 0
    %237 = vperm.xlu0 %236, %v232
    %v238 = vpop.permute.xlu0 %237
    %241 = vset.pattern.permute.xlu0 0
    %242 = vperm.xlu0 %241, %v233
    %v243 = vpop.permute.xlu0 %242
    %246 = vset.pattern.permute.xlu0 0
    %247 = vperm.xlu0 %246, %v234
    %v248 = vpop.permute.xlu0 %247
    %v251 = vsel %vm136, %v229, 0
    %v254 = vsel %vm136, %v230, 0
    %v257 = vsel %vm136, %v231, 0
    %259 = vmatprep.subr.mxu0 0.0
    %260 = vmatpush1.msra.mxu0 0.0
    %261 = vmatprep.subr.mxu0 0.0
    %262 = vmatpush1.msra.mxu0 0.0
    %263 = vmatprep.subr.mxu0 0.0
    %264 = vmatpush1.msra.mxu0 0.0
    %265 = vmatprep.subr.mxu0 0.0
    %266 = vmatpush1.msra.mxu0 0.0
    %267 = vmatprep.subr.mxu0 0.0
    %268 = vmatpush1.msra.mxu0 0.0
    %269 = vmatprep.subr.mxu0 0.0
    %270 = vmatpush1.msra.mxu0 0.0
    %271 = vmatprep.subr.mxu0 0.0
    %272 = vmatpush1.msra.mxu0 0.0
    %273 = vmatprep.subr.mxu0 0.0
    %274 = vmatpush1.msra.mxu0 0.0
    %275 = vmatprep.subr.mxu0 0.0
    %276 = vmatpush1.msra.mxu0 0.0
    %277 = vmatprep.subr.mxu0 0.0
    %278 = vmatpush1.msra.mxu0 0.0
    %279 = vmatprep.subr.mxu0 0.0
    %280 = vmatpush1.msra.mxu0 0.0
    %281 = vmatprep.subr.mxu0 0.0
    %282 = vmatpush1.msra.mxu0 0.0
    %283 = vmatprep.subr.mxu0 0.0
    %284 = vmatpush1.msra.mxu0 0.0
    %285 = vmatprep.subr.mxu0 0.0
    %286 = vmatpush1.msra.mxu0 %v228
    %287 = vmatprep.subr.mxu0 0.0
    %288 = vmatpush1.msra.mxu0 %v227
    %289 = vmatprep.subr.mxu0 0.0
    %290 = vmatpush1.msra.mxu0 %v226
    %291 = vmatprep.subr.mxu0 0.0
    %292 = vmatpush2.msra.mxu0 0.0
    %293 = vmatprep.subr.mxu0 0.0
    %294 = vmatpush2.msra.mxu0 0.0
    %295 = vmatprep.subr.mxu0 0.0
    %296 = vmatpush2.msra.mxu0 0.0
    %297 = vmatprep.subr.mxu0 0.0
    %298 = vmatpush2.msra.mxu0 0.0
    %299 = vmatprep.subr.mxu0 0.0
    %300 = vmatpush2.msra.mxu0 0.0
    %301 = vmatprep.subr.mxu0 0.0
    %302 = vmatpush2.msra.mxu0 0.0
    %303 = vmatprep.subr.mxu0 0.0
    %304 = vmatpush2.msra.mxu0 0.0
    %305 = vmatprep.subr.mxu0 0.0
    %306 = vmatpush2.msra.mxu0 0.0
    %307 = vmatprep.subr.mxu0 0.0
    %308 = vmatpush2.msra.mxu0 0.0
    %309 = vmatprep.subr.mxu0 0.0
    %310 = vmatpush2.msra.mxu0 0.0
    %311 = vmatprep.subr.mxu0 0.0
    %312 = vmatpush2.msra.mxu0 0.0
    %313 = vmatprep.subr.mxu0 0.0
    %314 = vmatpush2.msra.mxu0 0.0
    %315 = vmatprep.subr.mxu0 0.0
    %316 = vmatpush2.msra.mxu0 0.0
    %317 = vmatprep.subr.mxu0 0.0
    %318 = vmatpush2.msra.mxu0 0.0
    %319 = vmatprep.subr.mxu0 0.0
    %320 = vmatpush2.msra.mxu0 0.0
    %321 = vmatprep.subr.mxu0 0.0
    %322 = vmatpush2.msra.mxu0 0.0
    %323 = vmatprep.mubr.f32.mxu0 0.0
    %324 = vmatmul.mubr.f32.gmra.mxu0 %v251
    %v325 = vpop.f32.mrf.mxu0
    %v326 = vadd.f32 %v238, %v325
    %v327 = vpop.f32.mrf.mxu0
    %328 = vmatprep.mubr.f32.mxu0 0.0
    %329 = vmatmul.mubr.f32.gmra.mxu0 %v254
    %v330 = vpop.f32.mrf.mxu0
    %v331 = vadd.f32 %v243, %v330
    %v332 = vpop.f32.mrf.mxu0
    %333 = vmatprep.mubr.f32.mxu0 0.0
    %334 = vmatmul.mubr.f32.gmra.mxu0 %v257
    %v335 = vpop.f32.mrf.mxu0
    %v336 = vadd.f32 %v248, %v335
    %v337 = vpop.f32.mrf.mxu0
    %338 = vdwg.mxu0
    %v339 = vtanh.pop %v326
    %v340 = vtanh.pop %v331
    %v341 = vtanh.pop %v336
    %v342 = vld [vmem:[%s8] sm:$0x1]
    %v343 = vld [vmem:[#allocation2] sm:$0x1]
    %345 = vset.pattern.permute.xlu0 0
    %346 = vperm.xlu0 %345, %v343
    %v347 = vpop.permute.xlu0 %346
    %v349 = vlaneseq
    %v350 = vshrl.u32 %v349, 7
    %v351 = vsub.s32 0, %v350
    %v352 = vrot.slane %v347, %v351
    %v354 = vsel %vm136, %v342, 0
    %356 = vmatprep.subr.mxu0 0.0
    %357 = vmatpush1.msra.mxu0 0.0
    %358 = vmatprep.subr.mxu0 0.0
    %359 = vmatpush1.msra.mxu0 0.0
    %360 = vmatprep.subr.mxu0 0.0
    %361 = vmatpush1.msra.mxu0 0.0
    %362 = vmatprep.subr.mxu0 0.0
    %363 = vmatpush1.msra.mxu0 0.0
    %364 = vmatprep.subr.mxu0 0.0
    %365 = vmatpush1.msra.mxu0 0.0
    %366 = vmatprep.subr.mxu0 0.0
    %367 = vmatpush1.msra.mxu0 0.0
    %368 = vmatprep.subr.mxu0 0.0
    %369 = vmatpush1.msra.mxu0 0.0
    %370 = vmatprep.subr.mxu0 0.0
    %371 = vmatpush1.msra.mxu0 0.0
    %372 = vmatprep.subr.mxu0 0.0
    %373 = vmatpush1.msra.mxu0 0.0
    %374 = vmatprep.subr.mxu0 0.0
    %375 = vmatpush1.msra.mxu0 0.0
    %376 = vmatprep.subr.mxu0 0.0
    %377 = vmatpush1.msra.mxu0 0.0
    %378 = vmatprep.subr.mxu0 0.0
    %379 = vmatpush1.msra.mxu0 0.0
    %380 = vmatprep.subr.mxu0 0.0
    %381 = vmatpush1.msra.mxu0 0.0
    %382 = vmatprep.subr.mxu0 0.0
    %383 = vmatpush1.msra.mxu0 %v341
    %384 = vmatprep.subr.mxu0 0.0
    %385 = vmatpush1.msra.mxu0 %v340
    %386 = vmatprep.subr.mxu0 0.0
    %387 = vmatpush1.msra.mxu0 %v339
    %388 = vmatprep.subr.mxu0 0.0
    %389 = vmatpush2.msra.mxu0 0.0
    %390 = vmatprep.subr.mxu0 0.0
    %391 = vmatpush2.msra.mxu0 0.0
    %392 = vmatprep.subr.mxu0 0.0
    %393 = vmatpush2.msra.mxu0 0.0
    %394 = vmatprep.subr.mxu0 0.0
    %395 = vmatpush2.msra.mxu0 0.0
    %396 = vmatprep.subr.mxu0 0.0
    %397 = vmatpush2.msra.mxu0 0.0
    %398 = vmatprep.subr.mxu0 0.0
    %399 = vmatpush2.msra.mxu0 0.0
    %400 = vmatprep.subr.mxu0 0.0
    %401 = vmatpush2.msra.mxu0 0.0
    %402 = vmatprep.subr.mxu0 0.0
    %403 = vmatpush2.msra.mxu0 0.0
    %404 = vmatprep.subr.mxu0 0.0
    %405 = vmatpush2.msra.mxu0 0.0
    %406 = vmatprep.subr.mxu0 0.0
    %407 = vmatpush2.msra.mxu0 0.0
    %408 = vmatprep.subr.mxu0 0.0
    %409 = vmatpush2.msra.mxu0 0.0
    %410 = vmatprep.subr.mxu0 0.0
    %411 = vmatpush2.msra.mxu0 0.0
    %412 = vmatprep.subr.mxu0 0.0
    %413 = vmatpush2.msra.mxu0 0.0
    %414 = vmatprep.subr.mxu0 0.0
    %415 = vmatpush2.msra.mxu0 0.0
    %416 = vmatprep.subr.mxu0 0.0
    %417 = vmatpush2.msra.mxu0 0.0
    %418 = vmatprep.subr.mxu0 0.0
    %419 = vmatpush2.msra.mxu0 0.0
    %420 = vmatprep.mubr.f32.mxu0 0.0
    %421 = vmatmul.mubr.f32.gmra.mxu0 %v354
    %v422 = vpop.f32.mrf.mxu0
    %v423 = vadd.f32 %v352, %v422
    %v424 = vpop.f32.mrf.mxu0
    %425 = vdwg.mxu0
    %426 = vst [vmem:[#allocation3] sm:$0x1] %v423
    // Predicated region
    $region42: #{tpu_custom_call.1} parent=1 // pred_check
      _
    $region43: #{tpu_custom_call.1} parent=1 // pred_check_branch
      %428 = sbr.rel (0) target = $region45
    $region44: #{tpu_custom_call.1} parent=1 // pred_region
      %s430 = ssub.s32 16, 16
      %431 = vsyncadd [#allocation4], %s430
      %s433 = sshll.u32 [#allocation3], 4
      %s434 = int_to_ptr.vmem [resolvable:$true] %s433
      %436 = dma.vmem_to_hbm [thread:$0]  %s434, 16, %s10, [#allocation4]
    $region45: #{tpu_custom_call.1} parent=1 // pred_fallthru
      _
    // Predicated region
    $region46: #{tpu_custom_call.1} parent=1 // pred_check
      _
    $region47: #{tpu_custom_call.1} parent=1 // pred_check_branch
      %438 = sbr.rel (0) target = $region49
    $region48: #{tpu_custom_call.1} parent=1 // pred_region
      %439 = dma.done [#allocation4], 16
    $region49: #{tpu_custom_call.1} parent=1 // pred_fallthru
      _
    %440 = vsyncpa [#allocation4], 1

</llo_original>
